<compile_context>
chip_gen: v5e
topology: v5e:2x2
jax: 0.10.0
libtpu: 0.0.40
codegen_flags: <defaults>
</compile_context>

<pallas_src>
import math
from functools import partial

import jax
import jax.numpy as jnp
import numpy as np
from jax.experimental import pallas as pl
from jax.experimental.pallas import tpu as pltpu

MAGIC = 0.00057339936
EPS = 1e-6


def _round_up(x, m):
    return ((x + m - 1) // m) * m


def _wpdc_kernel(inp_ref, tgt_ref, const_ref, u_ref, wT_ref, out_ref, *, kp3):
    inp = inp_ref[...]                      # (TM, P) normalized params
    tgt = tgt_ref[...]
    consts = const_ref[...]                 # (8, P) fused constants
    m0s = consts[0:1, :]                    # |std| on pose cols {0,4,8}
    m1s = consts[1:2, :]                    # |std| on pose cols {1,5,9}
    m2s = consts[2:3, :]                    # |std| on pose cols {2,6,10}
    cs = consts[3:4, :]                     # |std|*(offset_norm | MAGIC*w_norm)
    eps = consts[4:5, :]                    # EPS everywhere but column 11

    # tmpv = u_base + [w_shp_base | w_exp_base] @ alpha_gt.
    # De-normalization of tgt is folded into u_eff / wT_eff host-side, so the
    # MXU consumes the raw target directly (bf16 pass, f32 accumulate).
    tmpv = u_ref[...] + jnp.dot(tgt.astype(jnp.bfloat16), wT_ref[...],
                                preferred_element_type=jnp.float32)   # (TM, Kp)

    # per-axis vertex norms; coordinate blocks are lane-aligned (kp3 % 128 == 0)
    n0 = jnp.sqrt(jnp.sum(tmpv[:, 0 * kp3:1 * kp3] ** 2, axis=1, keepdims=True))
    n1 = jnp.sqrt(jnp.sum(tmpv[:, 1 * kp3:2 * kp3] ** 2, axis=1, keepdims=True))
    n2 = jnp.sqrt(jnp.sum(tmpv[:, 2 * kp3:3 * kp3] ** 2, axis=1, keepdims=True))

    d = inp - tgt
    # |input_d - target_d| == |input - target| * |std|; |std| is baked into the
    # per-column scale rows, so weights = 3 FMAs + abs*scale + eps.
    scale = n0 * m0s + n1 * m1s + n2 * m2s + cs
    weights = jnp.abs(d) * scale + eps      # column 11 stays exactly 0

    maxes = jnp.max(weights, axis=1, keepdims=True)
    weights = weights * pl.reciprocal(maxes, approx=True)

    # per-tile partial sum of weights * (inp - tgt)^2 ; mean finished in wrapper
    partial_sum = jnp.sum(weights * d * d)
    out_ref[...] = jnp.broadcast_to(partial_sum, out_ref.shape)


def wpdc_loss_pallas(inp, tgt, std2d, mean2d, u_base, wT_full):
    N, P = inp.shape
    K = wT_full.shape[1]
    K3 = K // 3
    kp3 = _round_up(K3, 128)      # lane-aligned coordinate block
    Kp = 3 * kp3

    # ---- host-side precompute of module constants -------------------------
    wT_f32 = wT_full.astype(jnp.float32)
    w_norm = jnp.sqrt(jnp.sum(wT_f32 ** 2, axis=1))          # (62,) column norms
    offset_norm = math.sqrt(K3)
    std_f = std2d.astype(jnp.float32)
    mean_f = mean2d.astype(jnp.float32)
    std_abs = jnp.abs(std_f)

    m0 = np.zeros((1, P), np.float32); m0[0, [0, 4, 8]] = 1.0
    m1 = np.zeros((1, P), np.float32); m1[0, [1, 5, 9]] = 1.0
    m2 = np.zeros((1, P), np.float32); m2[0, [2, 6, 10]] = 1.0
    m_off = np.zeros((1, P), np.float32); m_off[0, [3, 7]] = 1.0
    m_se = np.zeros((1, P), np.float32); m_se[0, 12:] = 1.0
    eps_np = np.full((1, P), EPS, np.float32); eps_np[0, 11] = 0.0

    c_fold = std_abs * (offset_norm * jnp.asarray(m_off)
                        + MAGIC * jnp.asarray(m_se) * w_norm[None, :])
    consts = jnp.concatenate(
        [std_abs * jnp.asarray(m0), std_abs * jnp.asarray(m1),
         std_abs * jnp.asarray(m2), c_fold, jnp.asarray(eps_np),
         jnp.zeros((3, P), jnp.float32)], axis=0)            # (8, P) resident tile

    # ---- lane-align the gathered basis; fold the gt de-normalization ------
    u3 = u_base.astype(jnp.float32).reshape(3, K3)
    u_pad = jnp.zeros((3, kp3), jnp.float32).at[:, :K3].set(u3).reshape(1, Kp)
    w3 = wT_f32.reshape(P, 3, K3)
    w_pad = jnp.zeros((P, 3, kp3), jnp.float32).at[:, :, :K3].set(w3).reshape(P, Kp)
    u_eff = u_pad + mean_f @ w_pad                                   # (1, Kp) f32
    wT_eff = (std_f.reshape(P, 1) * w_pad).astype(jnp.bfloat16)      # (62, Kp) bf16

    # ---- pad / tile the batch ---------------------------------------------
    TM = 256 if N >= 256 else _round_up(N, 8)
    Np = _round_up(N, TM)
    if Np != N:
        pad = jnp.zeros((Np - N, P), inp.dtype)   # equal rows -> 0 contribution
        inp_p = jnp.concatenate([inp, pad], axis=0)
        tgt_p = jnp.concatenate([tgt, pad], axis=0)
    else:
        inp_p, tgt_p = inp, tgt
    G = Np // TM

    kernel = partial(_wpdc_kernel, kp3=kp3)
    out = pl.pallas_call(
        kernel,
        out_shape=jax.ShapeDtypeStruct((8, 128 * G), jnp.float32),
        grid=(G,),
        in_specs=[
            pl.BlockSpec((TM, P), lambda i: (i, 0)),     # inp tile
            pl.BlockSpec((TM, P), lambda i: (i, 0)),     # tgt tile
            pl.BlockSpec((8, P), lambda i: (0, 0)),      # fused constants (resident)
            pl.BlockSpec((1, Kp), lambda i: (0, 0)),     # u_eff (resident)
            pl.BlockSpec((P, Kp), lambda i: (0, 0)),     # wT_eff bf16 (resident)
        ],
        out_specs=pl.BlockSpec((8, 128), lambda i: (0, i)),
        compiler_params=pltpu.CompilerParams(
            dimension_semantics=("parallel",)),
    )(inp_p, tgt_p, consts, u_eff, wT_eff)

    total = jnp.sum(out[0, 0::128])            # one partial sum per tile
    return total / jnp.float32(N * P)


def wpdc_loss_ref(inp, tgt, std2d, mean2d, u_base, wT_full):
    """Pure-JAX/numpy f32 reference (same math as the PyTorch module)."""
    K = wT_full.shape[1]
    K3 = K // 3
    inp_d = inp * std2d + mean2d
    tgt_d = tgt * std2d + mean2d
    tmpv = u_base + tgt_d @ wT_full                      # (N, K)
    tn = jnp.stack([
        jnp.sqrt(jnp.sum(tmpv[:, c * K3:(c + 1) * K3] ** 2, axis=1)) for c in range(3)
    ], axis=1)                                           # (N, 3)
    offset_norm = math.sqrt(K3)
    w_norm = jnp.sqrt(jnp.sum(wT_full ** 2, axis=1))     # (62,)
    diff = jnp.abs(inp_d - tgt_d)
    N, P = inp.shape
    weights = np.zeros((N, P), np.float32)
    diff_np = np.asarray(diff)
    tn_np = np.asarray(tn)
    for ind in range(11):
        if ind in (0, 4, 8):
            weights[:, ind] = diff_np[:, ind] * tn_np[:, 0]
        elif ind in (1, 5, 9):
            weights[:, ind] = diff_np[:, ind] * tn_np[:, 1]
        elif ind in (2, 6, 10):
            weights[:, ind] = diff_np[:, ind] * tn_np[:, 2]
        else:
            weights[:, ind] = diff_np[:, ind] * offset_norm
    weights[:, 12:] = MAGIC * diff_np[:, 12:] * np.asarray(w_norm)[12:]
    weights[:, :11] += EPS
    weights[:, 12:] += EPS
    weights = weights / weights.max(axis=1, keepdims=True)
    weights[:, 11] = 0.0
    return float(np.mean(weights * np.asarray((inp - tgt) ** 2)))


if __name__ == "__main__":
    key = jax.random.PRNGKey(0)
    k = jax.random.split(key, 8)

    N = 2            # batch
    P = 62           # param dim (12 + 40 + 10)
    V = 64           # synthetic number of mesh vertices
    L = 3 * V        # rows of u / w_shp / w_exp
    N_KP = 16        # synthetic "keypoint" vertices
    RESAMPLE = 16    # resampled vertices

    # deterministic synthetic module constants
    param_mean = 0.1 * jax.random.normal(k[0], (P,), jnp.float32)
    param_std = jax.random.uniform(k[1], (P,), jnp.float32, 0.5, 1.5)
    u = jax.random.normal(k[2], (L, 1), jnp.float32)
    w_shp = 0.1 * jax.random.normal(k[3], (L, 40), jnp.float32)
    w_exp = 0.1 * jax.random.normal(k[4], (L, 10), jnp.float32)

    kp_verts = jnp.arange(0, V, V // N_KP, dtype=jnp.int32)                        # keypoint vertices
    resample_verts = jax.random.permutation(k[5], V)[:RESAMPLE].astype(jnp.int32)  # deterministic "randperm"
    # TODO(synk): torch.randperm resampling is done host-side (deterministic here), not inside the kernel.

    # glue: gather bases in coordinate-major order and pad pose rows with zeros
    verts = jnp.concatenate([kp_verts, resample_verts])                        # (K3,)
    rows = jnp.concatenate([3 * verts, 3 * verts + 1, 3 * verts + 2])          # (K,) coordinate-major
    u_base = u[rows, 0][None, :].astype(jnp.float32)                           # (1, K)
    w_base = jnp.concatenate([w_shp[rows], w_exp[rows]], axis=1)               # (K, 50)
    wT_full = jnp.concatenate(
        [jnp.zeros((12, w_base.shape[0]), jnp.float32), w_base.T], axis=0)     # (62, K)

    # forward inputs (62-d params)
    inp = jax.random.normal(k[6], (N, P), jnp.float32)
    tgt = jax.random.normal(k[7], (N, P), jnp.float32)

    std2d = param_std[None, :]
    mean2d = param_mean[None, :]

    loss = wpdc_loss_pallas(inp, tgt, std2d, mean2d, u_base, wT_full)
    jax.block_until_ready(loss)

    ref = wpdc_loss_ref(inp, tgt, std2d, mean2d, u_base, wT_full)
    assert np.allclose(float(loss), ref, rtol=2e-2, atol=1e-5), (float(loss), ref)

    print("KERNEL_OK")
</pallas_src>

<mosaic_0001>
module attributes {stable_mosaic.version = 11 : i64} {
  func.func @_wpdc_kernel(%arg0: i32, %arg1: memref<8x62xf32, #tpu.memory_space<vmem>>, %arg2: memref<8x62xf32, #tpu.memory_space<vmem>>, %arg3: memref<8x62xf32, #tpu.memory_space<vmem>>, %arg4: memref<1x384xf32, #tpu.memory_space<vmem>>, %arg5: memref<62x384xbf16, #tpu.memory_space<vmem>>, %arg6: memref<8x128xf32, #tpu.memory_space<vmem>>) attributes {dimension_semantics = [#tpu.dimension_semantics<parallel>], iteration_bounds = array<i64: 1>, scalar_prefetch = 0 : i64, scratch_operands = 0 : i64, tpu.core_type = #tpu.core_type<tc>, window_params = [{transform_indices = @transform_0, window_bounds = array<i64: 8, 62>}, {transform_indices = @transform_1, window_bounds = array<i64: 8, 62>}, {pipeline_mode = #tpu.pipeline_mode<synchronous>, transform_indices = @transform_2, window_bounds = array<i64: 8, 62>}, {pipeline_mode = #tpu.pipeline_mode<synchronous>, transform_indices = @transform_3, window_bounds = array<i64: 1, 384>}, {pipeline_mode = #tpu.pipeline_mode<synchronous>, transform_indices = @transform_4, window_bounds = array<i64: 62, 384>}, {transform_indices = @transform_5, window_bounds = array<i64: 8, 128>}]} {
    %c0 = arith.constant 0 : index
    %c0_0 = arith.constant 0 : index
    %0 = vector.load %arg1[%c0, %c0_0] : memref<8x62xf32, #tpu.memory_space<vmem>>, vector<8x62xf32>
    %c0_1 = arith.constant 0 : index
    %c0_2 = arith.constant 0 : index
    %1 = vector.load %arg2[%c0_1, %c0_2] : memref<8x62xf32, #tpu.memory_space<vmem>>, vector<8x62xf32>
    %c0_3 = arith.constant 0 : index
    %c0_4 = arith.constant 0 : index
    %2 = vector.load %arg3[%c0_3, %c0_4] : memref<8x62xf32, #tpu.memory_space<vmem>>, vector<8x62xf32>
    %3 = vector.extract_strided_slice %2 {offsets = [0, 0], sizes = [1, 62], strides = [1, 1]} : vector<8x62xf32> to vector<1x62xf32>
    %4 = vector.extract_strided_slice %2 {offsets = [1, 0], sizes = [1, 62], strides = [1, 1]} : vector<8x62xf32> to vector<1x62xf32>
    %5 = vector.extract_strided_slice %2 {offsets = [2, 0], sizes = [1, 62], strides = [1, 1]} : vector<8x62xf32> to vector<1x62xf32>
    %6 = vector.extract_strided_slice %2 {offsets = [3, 0], sizes = [1, 62], strides = [1, 1]} : vector<8x62xf32> to vector<1x62xf32>
    %7 = vector.extract_strided_slice %2 {offsets = [4, 0], sizes = [1, 62], strides = [1, 1]} : vector<8x62xf32> to vector<1x62xf32>
    %c0_5 = arith.constant 0 : index
    %c0_6 = arith.constant 0 : index
    %8 = vector.load %arg4[%c0_5, %c0_6] : memref<1x384xf32, #tpu.memory_space<vmem>>, vector<1x384xf32>
    %9 = arith.truncf %1 : vector<8x62xf32> to vector<8x62xbf16>
    %c0_7 = arith.constant 0 : index
    %c0_8 = arith.constant 0 : index
    %10 = vector.load %arg5[%c0_7, %c0_8] : memref<62x384xbf16, #tpu.memory_space<vmem>>, vector<62x384xbf16>
    %cst = arith.constant dense<0.000000e+00> : vector<8x384xf32>
    %11 = tpu.matmul %9, %10, %cst {dimension_numbers = #tpu.dot_dimension_numbers<[1], [0], [0], [1], [0, 0, 1, 1], [], []>} : vector<8x62xbf16>, vector<62x384xbf16>, vector<8x384xf32> -> vector<8x384xf32>
    %12 = vector.broadcast %8 : vector<1x384xf32> to vector<8x384xf32>
    %13 = arith.addf %12, %11 : vector<8x384xf32>
    %14 = vector.extract_strided_slice %13 {offsets = [0, 0], sizes = [8, 128], strides = [1, 1]} : vector<8x384xf32> to vector<8x128xf32>
    %15 = arith.mulf %14, %14 : vector<8x128xf32>
    %cst_9 = arith.constant dense<0.000000e+00> : vector<8xf32>
    %16 = vector.multi_reduction <add>, %15, %cst_9 [1] : vector<8x128xf32> to vector<8xf32>
    %17 = vector.shape_cast %16 : vector<8xf32> to vector<8x1xf32>
    %18 = math.sqrt %17 : vector<8x1xf32>
    %19 = vector.extract_strided_slice %13 {offsets = [0, 128], sizes = [8, 128], strides = [1, 1]} : vector<8x384xf32> to vector<8x128xf32>
    %20 = arith.mulf %19, %19 : vector<8x128xf32>
    %cst_10 = arith.constant dense<0.000000e+00> : vector<8xf32>
    %21 = vector.multi_reduction <add>, %20, %cst_10 [1] : vector<8x128xf32> to vector<8xf32>
    %22 = vector.shape_cast %21 : vector<8xf32> to vector<8x1xf32>
    %23 = math.sqrt %22 : vector<8x1xf32>
    %24 = vector.extract_strided_slice %13 {offsets = [0, 256], sizes = [8, 128], strides = [1, 1]} : vector<8x384xf32> to vector<8x128xf32>
    %25 = arith.mulf %24, %24 : vector<8x128xf32>
    %cst_11 = arith.constant dense<0.000000e+00> : vector<8xf32>
    %26 = vector.multi_reduction <add>, %25, %cst_11 [1] : vector<8x128xf32> to vector<8xf32>
    %27 = vector.shape_cast %26 : vector<8xf32> to vector<8x1xf32>
    %28 = math.sqrt %27 : vector<8x1xf32>
    %29 = arith.subf %0, %1 : vector<8x62xf32>
    %30 = vector.broadcast %18 : vector<8x1xf32> to vector<8x62xf32>
    %31 = vector.broadcast %3 : vector<1x62xf32> to vector<8x62xf32>
    %32 = arith.mulf %30, %31 : vector<8x62xf32>
    %33 = vector.broadcast %23 : vector<8x1xf32> to vector<8x62xf32>
    %34 = vector.broadcast %4 : vector<1x62xf32> to vector<8x62xf32>
    %35 = arith.mulf %33, %34 : vector<8x62xf32>
    %36 = arith.addf %32, %35 : vector<8x62xf32>
    %37 = vector.broadcast %28 : vector<8x1xf32> to vector<8x62xf32>
    %38 = vector.broadcast %5 : vector<1x62xf32> to vector<8x62xf32>
    %39 = arith.mulf %37, %38 : vector<8x62xf32>
    %40 = arith.addf %36, %39 : vector<8x62xf32>
    %41 = vector.broadcast %6 : vector<1x62xf32> to vector<8x62xf32>
    %42 = arith.addf %40, %41 : vector<8x62xf32>
    %43 = math.absf %29 : vector<8x62xf32>
    %44 = arith.mulf %43, %42 : vector<8x62xf32>
    %45 = vector.broadcast %7 : vector<1x62xf32> to vector<8x62xf32>
    %46 = arith.addf %44, %45 : vector<8x62xf32>
    %cst_12 = arith.constant dense<0xFF800000> : vector<8xf32>
    %47 = vector.multi_reduction <maximumf>, %46, %cst_12 [1] : vector<8x62xf32> to vector<8xf32>
    %48 = vector.shape_cast %47 : vector<8xf32> to vector<8x1xf32>
    %49 = tpu.reciprocal %48 {approx = true} : vector<8x1xf32> -> vector<8x1xf32>
    %50 = vector.broadcast %49 : vector<8x1xf32> to vector<8x62xf32>
    %51 = arith.mulf %46, %50 : vector<8x62xf32>
    %52 = arith.mulf %51, %29 : vector<8x62xf32>
    %53 = arith.mulf %52, %29 : vector<8x62xf32>
    %54 = vector.shape_cast %53 : vector<8x62xf32> to vector<1x8x62xf32>
    %cst_13 = arith.constant dense<0.000000e+00> : vector<1xf32>
    %55 = vector.multi_reduction <add>, %54, %cst_13 [1, 2] : vector<1x8x62xf32> to vector<1xf32>
    %56 = vector.shape_cast %55 : vector<1xf32> to vector<1x1x1xf32>
    %57 = vector.extract %56[0, 0, 0] : f32 from vector<1x1x1xf32>
    %58 = vector.broadcast %57 : f32 to vector<8x128xf32>
    %c0_14 = arith.constant 0 : index
    %c0_15 = arith.constant 0 : index
    %59 = vector.load %arg6[%c0_14, %c0_15] : memref<8x128xf32, #tpu.memory_space<vmem>>, vector<8x128xf32>
    tpu.vector_store %arg6[%c0_14, %c0_15], %58 {strides = array<i32>} : memref<8x128xf32, #tpu.memory_space<vmem>>, vector<8x128xf32>,
    return
  }
  func.func @transform_0(%arg0: i32) -> (i32, i32) {
    %c0_i32 = arith.constant 0 : i32
    %c0_i32_0 = arith.constant 0 : i32
    return %arg0, %c0_i32 : i32, i32
  }
  func.func @transform_1(%arg0: i32) -> (i32, i32) {
    %c0_i32 = arith.constant 0 : i32
    %c0_i32_0 = arith.constant 0 : i32
    return %arg0, %c0_i32 : i32, i32
  }
  func.func @transform_2(%arg0: i32) -> (i32, i32) {
    %c0_i32 = arith.constant 0 : i32
    %c0_i32_0 = arith.constant 0 : i32
    %c0_i32_1 = arith.constant 0 : i32
    return %c0_i32, %c0_i32_0 : i32, i32
  }
  func.func @transform_3(%arg0: i32) -> (i32, i32) {
    %c0_i32 = arith.constant 0 : i32
    %c0_i32_0 = arith.constant 0 : i32
    %c0_i32_1 = arith.constant 0 : i32
    return %c0_i32, %c0_i32_0 : i32, i32
  }
  func.func @transform_4(%arg0: i32) -> (i32, i32) {
    %c0_i32 = arith.constant 0 : i32
    %c0_i32_0 = arith.constant 0 : i32
    %c0_i32_1 = arith.constant 0 : i32
    return %c0_i32, %c0_i32_0 : i32, i32
  }
  func.func @transform_5(%arg0: i32) -> (i32, i32) {
    %c0_i32 = arith.constant 0 : i32
    %c0_i32_0 = arith.constant 0 : i32
    return %c0_i32, %arg0 : i32, i32
  }
}

</mosaic_0001>

<llo_original>
// kernel: tpu_custom_call.1
$region0: #{tpu_custom_call.1}
  #allocation0 [shape = 'u32[]', space=smem, size = 0x4, offset = 0x4, fixed_abs, tag = 'smem constant byte address 0x4 - core index']
  #allocation1 [shape = 'u32[72,128]{1,0:T(1,128)}', space=vmem, size = 0x9000, scoped, tag = 'internal scratch']
  %s0 = inlined_call_operand.hbm [shape: f32[8,62], index: 0, kind: input, shape index: {}]
  %s1 = inlined_call_operand.hbm [shape: f32[8,62], index: 1, kind: input, shape index: {}]
  %s2 = inlined_call_operand.hbm [shape: f32[8,62], index: 2, kind: input, shape index: {}]
  %s3 = inlined_call_operand.hbm [shape: f32[1,384], index: 3, kind: input, shape index: {}]
  %s4 = inlined_call_operand.hbm [shape: bf16[62,384], index: 4, kind: input, shape index: {}]
  %s5 = inlined_call_operand.hbm [shape: f32[8,128], index: 5, kind: output, shape index: {}]
  %s6 = sld [smem:[#allocation0]]
  $region50: #{tpu_custom_call.1} parent=0
    _
  %s8 = ssub.s32 1, %s6
  %s9 = scalar_select 0, %s8, %s6
  $region1: #{tpu_custom_call.1} parent=0
    #allocation2 [shape = 'u8[4096]{0}', space=vmem, size = 0x1000, scoped, tag = 'input window, operand 0, single buffered']
    #allocation3 [shape = 's32[1]{0}', space=sflag, size = 0x4, scoped, tag = 'scoped memory for tpu_custom_call.1']
    #allocation4 [shape = 's32[1]{0}', space=sflag, size = 0x4, scoped, tag = 'scoped memory for tpu_custom_call.1']
    #allocation5 [shape = 'u8[4096]{0}', space=vmem, size = 0x1000, scoped, tag = 'input window, operand 1, single buffered']
    #allocation6 [shape = 's32[1]{0}', space=sflag, size = 0x4, scoped, tag = 'scoped memory for tpu_custom_call.1']
    #allocation7 [shape = 'u8[4096]{0}', space=vmem, size = 0x1000, scoped, tag = 'input window, operand 2, single buffered']
    #allocation8 [shape = 'u8[1536]{0}', space=vmem, size = 0x800, scoped, tag = 'input window, operand 3, single buffered']
    #allocation9 [shape = 's32[1]{0}', space=sflag, size = 0x4, scoped, tag = 'scoped memory for tpu_custom_call.1']
    #allocation10 [shape = 'u8[49152]{0}', space=vmem, size = 0xc000, scoped, tag = 'input window, operand 4, single buffered']
    #allocation11 [shape = 'u8[4096]{0}', space=vmem, size = 0x1000, scoped, tag = 'output window, operand 0, single buffered']
    %10 = vsyncpa [#allocation3], 0
    %11 = vsyncpa [#allocation6], 0
    %12 = vsyncpa [#allocation9], 0
    %13 = vsyncpa [#allocation4], 0
    // Predicated region
    $region2: #{tpu_custom_call.1} parent=1 // pred_check
      _
    $region3: #{tpu_custom_call.1} parent=1 // pred_check_branch
      %15 = sbr.rel (0) target = $region5
    $region4: #{tpu_custom_call.1} parent=1 // pred_region
      %17 = vsyncadd [#allocation3], 0
      %s19 = sshll.u32 %s0, 4
      %s20 = int_to_ptr.hbm [resolvable:$true] %s19
      %s21 = sshll.u32 [#allocation2], 4
      %s22 = int_to_ptr.vmem [resolvable:$true] %s21
      %24 = dma.hbm_to_vmem [thread:$0]  %s20, 128, %s22, [#allocation3]
    $region5: #{tpu_custom_call.1} parent=1 // pred_fallthru
      _
    // Predicated region
    $region6: #{tpu_custom_call.1} parent=1 // pred_check
      _
    $region7: #{tpu_custom_call.1} parent=1 // pred_check_branch
      %26 = sbr.rel (0) target = $region9
    $region8: #{tpu_custom_call.1} parent=1 // pred_region
      %28 = vsyncadd [#allocation6], 0
      %s30 = sshll.u32 %s1, 4
      %s31 = int_to_ptr.hbm [resolvable:$true] %s30
      %s32 = sshll.u32 [#allocation5], 4
      %s33 = int_to_ptr.vmem [resolvable:$true] %s32
      %35 = dma.hbm_to_vmem [thread:$0]  %s31, 128, %s33, [#allocation6]
    $region9: #{tpu_custom_call.1} parent=1 // pred_fallthru
      _
    // Predicated region
    $region10: #{tpu_custom_call.1} parent=1 // pred_check
      _
    $region11: #{tpu_custom_call.1} parent=1 // pred_check_branch
      %37 = sbr.rel (0) target = $region13
    $region12: #{tpu_custom_call.1} parent=1 // pred_region
      %39 = vsyncadd [#allocation6], 0
      %s41 = sshll.u32 %s2, 4
      %s42 = int_to_ptr.hbm [resolvable:$true] %s41
      %s43 = sshll.u32 [#allocation7], 4
      %s44 = int_to_ptr.vmem [resolvable:$true] %s43
      %46 = dma.hbm_to_vmem [thread:$0]  %s42, 128, %s44, [#allocation6]
    $region13: #{tpu_custom_call.1} parent=1 // pred_fallthru
      _
    // Predicated region
    $region14: #{tpu_custom_call.1} parent=1 // pred_check
      _
    $region15: #{tpu_custom_call.1} parent=1 // pred_check_branch
      %48 = sbr.rel (0) target = $region17
    $region16: #{tpu_custom_call.1} parent=1 // pred_region
      %50 = vsyncadd [#allocation9], 0
      %s52 = sshll.u32 %s3, 4
      %s53 = int_to_ptr.hbm [resolvable:$true] %s52
      %s54 = sshll.u32 [#allocation8], 4
      %s55 = int_to_ptr.vmem [resolvable:$true] %s54
      %57 = dma.hbm_to_vmem [thread:$0]  %s53, 48, %s55, [#allocation9]
    $region17: #{tpu_custom_call.1} parent=1 // pred_fallthru
      _
    // Predicated region
    $region18: #{tpu_custom_call.1} parent=1 // pred_check
      _
    $region19: #{tpu_custom_call.1} parent=1 // pred_check_branch
      %59 = sbr.rel (0) target = $region21
    $region20: #{tpu_custom_call.1} parent=1 // pred_region
      %61 = vsyncadd [#allocation9], 0
      %s62 = sshll.u32 %s4, 4
      %s63 = int_to_ptr.hbm [resolvable:$true] %s62
      %s64 = sshll.u32 [#allocation10], 4
      %s65 = int_to_ptr.vmem [resolvable:$true] %s64
      %70 = dma.hbm_to_vmem [thread:$0]  %s63, 1536, %s65, [#allocation9], 192, 192, 12
    $region21: #{tpu_custom_call.1} parent=1 // pred_fallthru
      _
    // Predicated region
    $region22: #{tpu_custom_call.1} parent=1 // pred_check
      _
    $region23: #{tpu_custom_call.1} parent=1 // pred_check_branch
      %72 = sbr.rel (0) target = $region25
    $region24: #{tpu_custom_call.1} parent=1 // pred_region
      %74 = dma.done [#allocation3], 128
    $region25: #{tpu_custom_call.1} parent=1 // pred_fallthru
      _
    // Predicated region
    $region26: #{tpu_custom_call.1} parent=1 // pred_check
      _
    $region27: #{tpu_custom_call.1} parent=1 // pred_check_branch
      %76 = sbr.rel (0) target = $region29
    $region28: #{tpu_custom_call.1} parent=1 // pred_region
      %78 = dma.done [#allocation6], 128
    $region29: #{tpu_custom_call.1} parent=1 // pred_fallthru
      _
    // Predicated region
    $region30: #{tpu_custom_call.1} parent=1 // pred_check
      _
    $region31: #{tpu_custom_call.1} parent=1 // pred_check_branch
      %80 = sbr.rel (0) target = $region33
    $region32: #{tpu_custom_call.1} parent=1 // pred_region
      %82 = dma.done [#allocation6], 128
    $region33: #{tpu_custom_call.1} parent=1 // pred_fallthru
      _
    // Predicated region
    $region34: #{tpu_custom_call.1} parent=1 // pred_check
      _
    $region35: #{tpu_custom_call.1} parent=1 // pred_check_branch
      %84 = sbr.rel (0) target = $region37
    $region36: #{tpu_custom_call.1} parent=1 // pred_region
      %86 = dma.done [#allocation9], 48
    $region37: #{tpu_custom_call.1} parent=1 // pred_fallthru
      _
    // Predicated region
    $region38: #{tpu_custom_call.1} parent=1 // pred_check
      _
    $region39: #{tpu_custom_call.1} parent=1 // pred_check_branch
      %88 = sbr.rel (0) target = $region41
    $region40: #{tpu_custom_call.1} parent=1 // pred_region
      %90 = dma.done [#allocation9], 1536
    $region41: #{tpu_custom_call.1} parent=1 // pred_fallthru
      _
    %v92 = vld [vmem:[#allocation2] sm:$0xff]
    %v93 = vld [vmem:[#allocation5] sm:$0xff]
    %v94 = vld [vmem:[#allocation7] sm:$0xff]
    %v95 = vld [vmem:[#allocation8] sm:$0x7]
    %v96 = vpack.c.bf16 %v93, %v93
    %v97 = vld [vmem:[#allocation10] sm:$0xff]
    %v98 = vld [vmem:[#allocation10 + $0x8] sm:$0xf]
    %v99 = vld [vmem:[#allocation10 + $0xc] sm:$0xff]
    %v100 = vld [vmem:[#allocation10 + $0x14] sm:$0xf]
    %v101 = vld [vmem:[#allocation10 + $0x18] sm:$0xff]
    %v102 = vld [vmem:[#allocation10 + $0x20] sm:$0xf]
    %v103 = vld [vmem:[#allocation10 + $0x24] sm:$0xff]
    %v104 = vld [vmem:[#allocation10 + $0x2c] sm:$0xf]
    %v105 = vld [vmem:[#allocation10 + $0x30] sm:$0xff]
    %v106 = vld [vmem:[#allocation10 + $0x38] sm:$0xf]
    %v107 = vld [vmem:[#allocation10 + $0x3c] sm:$0xff]
    %v108 = vld [vmem:[#allocation10 + $0x44] sm:$0xf]
    %v109 = vld [vmem:[#allocation10 + $0x48] sm:$0xff]
    %v110 = vld [vmem:[#allocation10 + $0x50] sm:$0xf]
    %v111 = vld [vmem:[#allocation10 + $0x54] sm:$0x77]
    %v112 = vld [vmem:[#allocation10 + $0x5c] sm:$0x7]
    %v129 = vunpack.c.l.b16 %v97
    %v130 = vunpack.c.h.b16 %v97
    %v131 = vunpack.c.l.b16 %v98
    %v132 = vunpack.c.l.b16 %v99
    %v133 = vunpack.c.h.b16 %v99
    %v134 = vunpack.c.l.b16 %v100
    %v135 = vunpack.c.l.b16 %v101
    %v136 = vunpack.c.h.b16 %v101
    %v137 = vunpack.c.l.b16 %v102
    %v138 = vunpack.c.l.b16 %v103
    %v139 = vunpack.c.h.b16 %v103
    %v140 = vunpack.c.l.b16 %v104
    %v141 = vunpack.c.l.b16 %v105
    %v142 = vunpack.c.h.b16 %v105
    %v143 = vunpack.c.l.b16 %v106
    %v144 = vunpack.c.l.b16 %v107
    %v145 = vunpack.c.h.b16 %v107
    %v146 = vunpack.c.l.b16 %v108
    %v147 = vunpack.c.l.b16 %v109
    %v148 = vunpack.c.h.b16 %v109
    %v149 = vunpack.c.l.b16 %v110
    %v150 = vunpack.c.l.b16 %v111
    %v151 = vunpack.c.h.b16 %v111
    %v152 = vunpack.c.l.b16 %v112
    %v153 = vpack.c.b16 %v132, %v129
    %v154 = vpack.c.b16 %v133, %v130
    %v155 = vpack.c.b16 %v134, %v131
    %v156 = vpack.c.b16 %v138, %v135
    %v157 = vpack.c.b16 %v139, %v136
    %v158 = vpack.c.b16 %v140, %v137
    %v159 = vpack.c.b16 %v144, %v141
    %v160 = vpack.c.b16 %v145, %v142
    %v161 = vpack.c.b16 %v146, %v143
    %v162 = vpack.c.b16 %v150, %v147
    %v163 = vpack.c.b16 %v151, %v148
    %v164 = vpack.c.b16 %v152, %v149
    %vm174 = vcmask 506880
    %v176 = vsel %vm174, %v96, 0
    %vm178 = vcmask 1046528
    %v180 = vsel %vm178, %v162, 0
    %v183 = vsel %vm178, %v163, 0
    %v186 = vsel %vm178, %v164, 0
    %188 = vmatpush.bf16.msra.mxu0 0
    %189 = vmatpush.bf16.msra.mxu0 0
    %190 = vmatpush.bf16.msra.mxu0 0
    %191 = vmatpush.bf16.msra.mxu0 0
    %192 = vmatpush.bf16.msra.mxu0 %v180
    %193 = vmatpush.bf16.msra.mxu0 %v159
    %194 = vmatpush.bf16.msra.mxu0 %v156
    %195 = vmatpush.bf16.msra.mxu0 %v153
    %196 = vmatmul.bf16.gmra.mxu0 %v176
    %v197 = vpop.f32.mrf.mxu0
    %v198 = vadd.f32 0.0, %v197
    %v199 = vpop.f32.mrf.mxu0
    %200 = vdwg.mxu0
    %201 = vmatpush.bf16.msra.mxu0 0
    %202 = vmatpush.bf16.msra.mxu0 0
    %203 = vmatpush.bf16.msra.mxu0 0
    %204 = vmatpush.bf16.msra.mxu0 0
    %205 = vmatpush.bf16.msra.mxu0 %v183
    %206 = vmatpush.bf16.msra.mxu0 %v160
    %207 = vmatpush.bf16.msra.mxu0 %v157
    %208 = vmatpush.bf16.msra.mxu0 %v154
    %209 = vmatmul.bf16.gmra.mxu0 %v176
    %v210 = vpop.f32.mrf.mxu0
    %v211 = vadd.f32 0.0, %v210
    %v212 = vpop.f32.mrf.mxu0
    %213 = vdwg.mxu0
    %214 = vmatpush.bf16.msra.mxu0 0
    %215 = vmatpush.bf16.msra.mxu0 0
    %216 = vmatpush.bf16.msra.mxu0 0
    %217 = vmatpush.bf16.msra.mxu0 0
    %218 = vmatpush.bf16.msra.mxu0 %v186
    %219 = vmatpush.bf16.msra.mxu0 %v161
    %220 = vmatpush.bf16.msra.mxu0 %v158
    %221 = vmatpush.bf16.msra.mxu0 %v155
    %222 = vmatmul.bf16.gmra.mxu0 %v176
    %v223 = vpop.f32.mrf.mxu0
    %v224 = vadd.f32 0.0, %v223
    %v225 = vpop.f32.mrf.mxu0
    %226 = vdwg.mxu0
    %v228 = vperm.slane %v95, 0
    %v229 = vperm.slane %v95, 1
    %v230 = vperm.slane %v95, 2
    %v234 = vadd.f32 %v228, %v198
    %v235 = vadd.f32 %v229, %v211
    %v236 = vadd.f32 %v230, %v224
    %v237 = vmul.f32 %v234, %v234
    %238 = vadd.xlane.f32.xlu0 %v237
    %v239 = vpop.xlane.xlu0 %238
    %v240 = vrsqrt.pop %v239
    %v241 = vmul.f32 %v240, %v239
    %v242 = vmul.f32 %v241, %v240
    %v243 = vmul.f32 0.5, %v242
    %v244 = vsub.f32 1.5, %v243
    %v245 = vmul.f32 %v240, %v244
    %v246 = vmul.f32 %v239, %v245
    %vm247 = vcmp.eq.f32.partialorder %v239, inf
    %v248 = vsel %vm247, %v239, %v246
    %vm249 = vcmp.eq.f32.partialorder %v239, 0.0
    %v250 = vand.u32 %v239, 2147483648
    %v251 = vsel %vm249, %v250, %v248
    %v252 = vmul.f32 %v235, %v235
    %253 = vadd.xlane.f32.xlu0 %v252
    %v254 = vpop.xlane.xlu0 %253
    %v255 = vrsqrt.pop %v254
    %v256 = vmul.f32 %v255, %v254
    %v257 = vmul.f32 %v256, %v255
    %v258 = vmul.f32 0.5, %v257
    %v259 = vsub.f32 1.5, %v258
    %v260 = vmul.f32 %v255, %v259
    %v261 = vmul.f32 %v254, %v260
    %vm262 = vcmp.eq.f32.partialorder %v254, inf
    %v263 = vsel %vm262, %v254, %v261
    %vm264 = vcmp.eq.f32.partialorder %v254, 0.0
    %v265 = vand.u32 %v254, 2147483648
    %v266 = vsel %vm264, %v265, %v263
    %v267 = vmul.f32 %v236, %v236
    %268 = vadd.xlane.f32.xlu0 %v267
    %v269 = vpop.xlane.xlu0 %268
    %v270 = vrsqrt.pop %v269
    %v271 = vmul.f32 %v270, %v269
    %v272 = vmul.f32 %v271, %v270
    %v273 = vmul.f32 0.5, %v272
    %v274 = vsub.f32 1.5, %v273
    %v275 = vmul.f32 %v270, %v274
    %v276 = vmul.f32 %v269, %v275
    %vm277 = vcmp.eq.f32.partialorder %v269, inf
    %v278 = vsel %vm277, %v269, %v276
    %vm279 = vcmp.eq.f32.partialorder %v269, 0.0
    %v280 = vand.u32 %v269, 2147483648
    %v281 = vsel %vm279, %v280, %v278
    %v282 = vsub.f32 %v92, %v93
    %v283 = vperm.slane %v94, 0
    %v284 = vmul.f32 %v251, %v283
    %v285 = vperm.slane %v94, 1
    %v286 = vmul.f32 %v266, %v285
    %v287 = vadd.f32 %v284, %v286
    %v288 = vperm.slane %v94, 2
    %v289 = vmul.f32 %v281, %v288
    %v290 = vadd.f32 %v287, %v289
    %v291 = vperm.slane %v94, 3
    %v292 = vadd.f32 %v290, %v291
    %v293 = vand.u32 2147483647, %v282
    %v294 = vmul.f32 %v293, %v292
    %v295 = vperm.slane %v94, 4
    %v296 = vadd.f32 %v294, %v295
    %v297 = vsel %vm174, %v296, -inf
    %298 = vmax.xlane.f32.xlu0 %v297
    %v299 = vpop.xlane.xlu0 %298
    %v300 = vrcp.pop %v299
    %v301 = vmul.f32 %v296, %v300
    %v302 = vmul.f32 %v301, %v282
    %v303 = vmul.f32 %v302, %v282
    %v304 = vsel %vm174, %v303, 0.0
    %305 = vadd.xlane.f32.xlu0 %v304
    %v306 = vpop.xlane.xlu0 %305
    %v307 = vrot.slane %v306, 4
    %v308 = vadd.f32 %v306, %v307
    %v309 = vrot.slane %v308, 2
    %v310 = vadd.f32 %v308, %v309
    %v311 = vrot.slane %v310, 1
    %v312 = vadd.f32 %v310, %v311
    %s313 = vtos %v312
    %v314 = vstv %s313
    %315 = vst [vmem:[#allocation11] sm:$0xff] %v314
    // Predicated region
    $region42: #{tpu_custom_call.1} parent=1 // pred_check
      _
    $region43: #{tpu_custom_call.1} parent=1 // pred_check_branch
      %317 = sbr.rel (0) target = $region45
    $region44: #{tpu_custom_call.1} parent=1 // pred_region
      %319 = vsyncadd [#allocation4], 0
      %s321 = sshll.u32 [#allocation11], 4
      %s322 = int_to_ptr.vmem [resolvable:$true] %s321
      %s323 = sshll.u32 %s5, 4
      %s324 = int_to_ptr.hbm [resolvable:$true] %s323
      %326 = dma.vmem_to_hbm [thread:$0]  %s322, 128, %s324, [#allocation4]
    $region45: #{tpu_custom_call.1} parent=1 // pred_fallthru
      _
    // Predicated region
    $region46: #{tpu_custom_call.1} parent=1 // pred_check
      _
    $region47: #{tpu_custom_call.1} parent=1 // pred_check_branch
      %328 = sbr.rel (0) target = $region49
    $region48: #{tpu_custom_call.1} parent=1 // pred_region
      %330 = dma.done [#allocation4], 128
    $region49: #{tpu_custom_call.1} parent=1 // pred_fallthru
      _
    %331 = vsyncpa [#allocation3], 1
    %332 = vsyncpa [#allocation6], 1
    %333 = vsyncpa [#allocation9], 1
    %334 = vsyncpa [#allocation4], 1

</llo_original>
